<compile_context>
chip_gen: v7x
topology: tpu7x:2x2x1
jax: 0.10.0
libtpu: 0.0.40
codegen_flags: <defaults>
</compile_context>

<pallas_src>
import functools

import jax
import jax.numpy as jnp
from jax.experimental import pallas as pl
from jax.experimental.pallas import tpu as pltpu

EPS = 1e-5


def _conv_bn_add_relu_kernel(x_ref, w_ref, gamma_ref, beta_ref, res_ref, o_ref):
    # x_ref:     (M, Cin)   stride-2-subsampled pixels as rows (grid-invariant block)
    # w_ref:     (Cin, TN)  Cout-tile of the 1x1 conv weight (streaming dtype, bf16 default)
    # gamma_ref: (1, TN)    BN scale tile (f32)
    # beta_ref:  (1, TN)    BN shift tile (f32)
    # res_ref:   (M, TN)    residual tile (f32)
    # o_ref:     (M, TN)    output tile (f32)
    y = jnp.dot(x_ref[...], w_ref[...], preferred_element_type=jnp.float32)  # MXU, f32 acc

    # BatchNorm (training-mode batch stats, biased variance), one-pass over rows.
    # Rows are never split by the Cout tiling, so per-tile stats are exact.
    inv_m = 1.0 / y.shape[0]
    mean = jnp.sum(y, axis=0, keepdims=True) * inv_m                    # (1, TN)
    ex2 = jnp.sum(y * y, axis=0, keepdims=True) * inv_m                 # (1, TN)
    var = jnp.maximum(ex2 - mean * mean, 0.0)

    # Fold BN into one scale/shift -> single FMA over the (M, TN) tile.
    scale = gamma_ref[...] * jax.lax.rsqrt(var + EPS)                   # rsqrt -> EUP slot
    shift = beta_ref[...] - mean * scale

    # fused: BN affine + residual add + ReLU
    o_ref[...] = jnp.maximum(y * scale + shift + res_ref[...], 0.0)


def prepare_conv_weight(weight, dtype=jnp.bfloat16):
    """One-time (parameter-load) prep of the Conv2d weight.

    Accepts (Cout, Cin, 1, 1) or (Cout, Cin); returns a (Cin, Cout) matmul operand in the
    streaming dtype.  Doing the cast/transpose here (not per forward call) avoids an extra
    f32 HBM round trip that would eat most of the bf16 bandwidth win.
    """
    w = weight.reshape(weight.shape[0], weight.shape[1])      # (Cout, Cin)
    return jnp.transpose(w, (1, 0)).astype(dtype)             # (Cin, Cout)


def _default_tn(Cout, Cin, m_rows, w_itemsize):
    """Cout tile width: fewest / most even tiles that fit the VMEM budget.

    Prefers an even tile count so v7x megacore splits the HBM-bound weight bytes near
    1:1 across its two TensorCores; the budget keeps the double-buffered streams under
    the most restrictive default scoped VMEM (v5e: 16 MiB) with headroom.
    """
    if Cout % 128 != 0:
        return Cout
    budget = 13 * (1 << 20)

    def streamed_bytes(tn):
        w = 2 * Cin * tn * w_itemsize          # double-buffered weight tile (dominant)
        io = 2 * 2 * m_rows * tn * 4           # residual + output tiles (f32), 2 buffers
        bn = 2 * 2 * tn * 4                    # gamma + beta tiles
        x = 2 * m_rows * Cin * 4               # grid-invariant x block (worst-case f32)
        return w + io + bn + x

    for n_tiles in (2, 4, 6, 8, 12, 16, 32, 64):
        tn = min(Cout, pl.cdiv(pl.cdiv(Cout, n_tiles), 128) * 128)
        if streamed_bytes(tn) <= budget:
            return tn
    return 128


def conv_bn_add_relu(x_nchw, residual_nchw, w_mat, gamma, beta, *, tn=None,
                     out_layout="NCHW"):
    """Forward pass of the module.

    x_nchw:        (N, Cin, H, W) f32
    residual_nchw: (N, Cout, ceil(H/2), ceil(W/2)) f32
    w_mat:         (Cin, Cout) conv weight from prepare_conv_weight() (bf16 by default)
    gamma, beta:   (Cout,) BN affine parameters
    out_layout:    "NCHW" (PyTorch convention) or "NHWC" (skips the final relayout).
    """
    N, Cin, H, W = x_nchw.shape
    Cin_w, Cout = w_mat.shape
    assert Cin_w == Cin, (Cin_w, Cin)
    Hout, Wout = (H - 1) // 2 + 1, (W - 1) // 2 + 1

    # Stride-2 subsample for the 1x1 conv, then flatten to rows x channels.
    # (These relayouts are small next to the weight stream; produce NHWC upstream and
    #  use out_layout="NHWC" to eliminate them entirely.)
    x_sub = x_nchw[:, :, ::2, ::2]                                   # (N, Cin, Hout, Wout)
    x_rows = jnp.transpose(x_sub, (0, 2, 3, 1)).reshape(-1, Cin)     # (M, Cin)
    # Match the MXU operand dtype to the streaming weight dtype (native bf16 passes,
    # f32 accumulation); x is tiny (~0.3 MB at the real shape) so this cast is cheap.
    x_rows = x_rows.astype(w_mat.dtype)
    res_rows = jnp.transpose(residual_nchw, (0, 2, 3, 1)).reshape(-1, Cout)  # (M, Cout)
    res_rows = res_rows.astype(jnp.float32)

    gamma2d = gamma.reshape(1, Cout).astype(jnp.float32)
    beta2d = beta.reshape(1, Cout).astype(jnp.float32)

    M = x_rows.shape[0]
    if tn is None:
        tn = _default_tn(Cout, Cin, M, w_mat.dtype.itemsize)
    grid = (pl.cdiv(Cout, tn),)

    cost = pl.CostEstimate(
        flops=2 * M * Cin * Cout,
        transcendentals=Cout,
        bytes_accessed=(M * Cin * x_rows.dtype.itemsize
                        + Cin * Cout * w_mat.dtype.itemsize
                        + 2 * M * Cout * 4
                        + 2 * Cout * 4),
    )

    out_rows = pl.pallas_call(
        _conv_bn_add_relu_kernel,
        out_shape=jax.ShapeDtypeStruct((M, Cout), jnp.float32),
        grid=grid,
        in_specs=[
            pl.BlockSpec((M, Cin), lambda j: (0, 0)),    # x: grid-invariant, stays resident
            pl.BlockSpec((Cin, tn), lambda j: (0, j)),   # weight tile (dominant HBM bytes)
            pl.BlockSpec((1, tn), lambda j: (0, j)),     # gamma tile
            pl.BlockSpec((1, tn), lambda j: (0, j)),     # beta tile
            pl.BlockSpec((M, tn), lambda j: (0, j)),     # residual tile
        ],
        out_specs=pl.BlockSpec((M, tn), lambda j: (0, j)),
        compiler_params=pltpu.CompilerParams(
            # Cout tiles are fully independent (BN stats are over rows only): v7x megacore
            # shards them across both TensorCores; free/neutral on v5e/v6e.
            dimension_semantics=("parallel",),
            # >= every generation's default scoped VMEM except v5e (16 MiB), which it
            # raises; well under v7x's 64 MiB physical.
            vmem_limit_bytes=32 * 1024 * 1024,
        ),
        cost_estimate=cost,
    )(x_rows, w_mat, gamma2d, beta2d, res_rows)

    out_nhwc = out_rows.reshape(N, Hout, Wout, Cout)
    if out_layout == "NHWC":
        return out_nhwc
    # NCHW to match the PyTorch module output convention.
    return jnp.transpose(out_nhwc, (0, 3, 1, 2))


def reference(x_nchw, residual_nchw, weight_oi, gamma, beta, *, compute_dtype=jnp.float32):
    """Pure-JAX reference (optionally with bf16-cast matmul operands for the bf16 path)."""
    x_sub = x_nchw[:, :, ::2, ::2].astype(compute_dtype)
    w = weight_oi.astype(compute_dtype)
    y = jnp.einsum('nchw,oc->nohw', x_sub, w, preferred_element_type=jnp.float32)
    mean = jnp.mean(y, axis=(0, 2, 3), keepdims=True)
    var = jnp.mean((y - mean) ** 2, axis=(0, 2, 3), keepdims=True)
    y_hat = (y - mean) * jax.lax.rsqrt(var + EPS)
    out = y_hat * gamma.reshape(1, -1, 1, 1) + beta.reshape(1, -1, 1, 1)
    return jnp.maximum(out + residual_nchw, 0.0)


if __name__ == "__main__":
    # Small shapes consistent with the module (real: 1x1392x14x14 -> 1x3712x7x7).
    # Cout=384 exercises the Cout grid with a ragged final tile (default tn=256 -> 256+128)
    # through the masked partial-block path; M = 2*8*8 = 128 rows.
    N, Cin, Cout, H, W = 2, 128, 384, 16, 16
    Hout, Wout = 8, 8

    key = jax.random.PRNGKey(0)
    kx, kr, kw, kg, kb = jax.random.split(key, 5)

    x313 = jax.random.normal(kx, (N, Cin, H, W), dtype=jnp.float32)
    x329 = jax.random.normal(kr, (N, Cout, Hout, Wout), dtype=jnp.float32)

    # Deterministic parameter init (Conv2d weight ~ small random; BN affine exercised).
    weight = jax.random.normal(kw, (Cout, Cin), dtype=jnp.float32) * 0.05
    gamma = 1.0 + 0.1 * jax.random.normal(kg, (Cout,), dtype=jnp.float32)
    beta = 0.1 * jax.random.normal(kb, (Cout,), dtype=jnp.float32)

    fwd = jax.jit(conv_bn_add_relu, static_argnames=("tn", "out_layout"))

    # --- exact-semantics path (f32 weights) vs pure-f32 reference ---
    w_mat_f32 = prepare_conv_weight(weight, jnp.float32)
    out_f32 = jax.block_until_ready(fwd(x313, x329, w_mat_f32, gamma, beta))
    ref_f32 = reference(x313, x329, weight, gamma, beta)
    assert out_f32.shape == (N, Cout, Hout, Wout)
    assert jnp.allclose(out_f32, ref_f32, atol=2e-4, rtol=2e-4), "f32 mismatch vs reference"

    # --- default path (bf16 weight streaming, f32 accumulation) vs matched reference ---
    w_mat_bf16 = prepare_conv_weight(weight)                    # cast hoisted to load time
    out_bf16 = jax.block_until_ready(fwd(x313, x329, w_mat_bf16, gamma, beta))
    ref_bf16 = reference(x313, x329, weight, gamma, beta, compute_dtype=jnp.bfloat16)
    assert out_bf16.shape == (N, Cout, Hout, Wout)
    assert bool(jnp.all(jnp.isfinite(out_bf16)))
    assert jnp.allclose(out_bf16, ref_bf16, atol=2e-3, rtol=2e-3), "bf16 mismatch vs reference"

    print("KERNEL_OK")
</pallas_src>

<mosaic_0001>
module attributes {stable_mosaic.version = 11 : i64} {
  func.func @_conv_bn_add_relu_kernel(%arg0: i32, %arg1: memref<128x128xf32, #tpu.memory_space<vmem>>, %arg2: memref<128x256xf32, #tpu.memory_space<vmem>>, %arg3: memref<1x256xf32, #tpu.memory_space<vmem>>, %arg4: memref<1x256xf32, #tpu.memory_space<vmem>>, %arg5: memref<128x256xf32, #tpu.memory_space<vmem>>, %arg6: memref<128x256xf32, #tpu.memory_space<vmem>>) attributes {dimension_semantics = [#tpu.dimension_semantics<parallel>], iteration_bounds = array<i64: 2>, scalar_prefetch = 0 : i64, scratch_operands = 0 : i64, tpu.core_type = #tpu.core_type<tc>, window_params = [{pipeline_mode = #tpu.pipeline_mode<synchronous>, transform_indices = @transform_0, window_bounds = array<i64: 128, 128>}, {transform_indices = @transform_1, window_bounds = array<i64: 128, 256>}, {transform_indices = @transform_2, window_bounds = array<i64: 1, 256>}, {transform_indices = @transform_3, window_bounds = array<i64: 1, 256>}, {transform_indices = @transform_4, window_bounds = array<i64: 128, 256>}, {transform_indices = @transform_5, window_bounds = array<i64: 128, 256>}]} {
    %c0 = arith.constant 0 : index
    %c0_0 = arith.constant 0 : index
    %0 = vector.load %arg1[%c0, %c0_0] : memref<128x128xf32, #tpu.memory_space<vmem>>, vector<128x128xf32>
    %c0_1 = arith.constant 0 : index
    %c0_2 = arith.constant 0 : index
    %1 = vector.load %arg2[%c0_1, %c0_2] : memref<128x256xf32, #tpu.memory_space<vmem>>, vector<128x256xf32>
    %cst = arith.constant dense<0.000000e+00> : vector<128x256xf32>
    %2 = tpu.matmul %0, %1, %cst {dimension_numbers = #tpu.dot_dimension_numbers<[1], [0], [0], [1], [0, 0, 1, 1], [], []>} : vector<128x128xf32>, vector<128x256xf32>, vector<128x256xf32> -> vector<128x256xf32>
    %cst_3 = arith.constant dense<0.000000e+00> : vector<256xf32>
    %3 = vector.multi_reduction <add>, %2, %cst_3 [0] : vector<128x256xf32> to vector<256xf32>
    %4 = vector.shape_cast %3 : vector<256xf32> to vector<1x256xf32>
    %cst_4 = arith.constant 7.812500e-03 : f32
    %5 = vector.broadcast %cst_4 : f32 to vector<1x256xf32>
    %6 = arith.mulf %4, %5 : vector<1x256xf32>
    %7 = arith.mulf %2, %2 : vector<128x256xf32>
    %cst_5 = arith.constant dense<0.000000e+00> : vector<256xf32>
    %8 = vector.multi_reduction <add>, %7, %cst_5 [0] : vector<128x256xf32> to vector<256xf32>
    %9 = vector.shape_cast %8 : vector<256xf32> to vector<1x256xf32>
    %cst_6 = arith.constant 7.812500e-03 : f32
    %10 = vector.broadcast %cst_6 : f32 to vector<1x256xf32>
    %11 = arith.mulf %9, %10 : vector<1x256xf32>
    %12 = arith.mulf %6, %6 : vector<1x256xf32>
    %13 = arith.subf %11, %12 : vector<1x256xf32>
    %cst_7 = arith.constant 0.000000e+00 : f32
    %14 = vector.broadcast %cst_7 : f32 to vector<1x256xf32>
    %15 = arith.maximumf %13, %14 : vector<1x256xf32>
    %c0_8 = arith.constant 0 : index
    %c0_9 = arith.constant 0 : index
    %16 = vector.load %arg3[%c0_8, %c0_9] : memref<1x256xf32, #tpu.memory_space<vmem>>, vector<1x256xf32>
    %cst_10 = arith.constant 9.99999974E-6 : f32
    %17 = vector.broadcast %cst_10 : f32 to vector<1x256xf32>
    %18 = arith.addf %15, %17 : vector<1x256xf32>
    %19 = math.rsqrt %18 : vector<1x256xf32>
    %20 = arith.mulf %16, %19 : vector<1x256xf32>
    %c0_11 = arith.constant 0 : index
    %c0_12 = arith.constant 0 : index
    %21 = vector.load %arg4[%c0_11, %c0_12] : memref<1x256xf32, #tpu.memory_space<vmem>>, vector<1x256xf32>
    %22 = arith.mulf %6, %20 : vector<1x256xf32>
    %23 = arith.subf %21, %22 : vector<1x256xf32>
    %24 = vector.broadcast %20 : vector<1x256xf32> to vector<128x256xf32>
    %25 = arith.mulf %2, %24 : vector<128x256xf32>
    %26 = vector.broadcast %23 : vector<1x256xf32> to vector<128x256xf32>
    %27 = arith.addf %25, %26 : vector<128x256xf32>
    %c0_13 = arith.constant 0 : index
    %c0_14 = arith.constant 0 : index
    %28 = vector.load %arg5[%c0_13, %c0_14] : memref<128x256xf32, #tpu.memory_space<vmem>>, vector<128x256xf32>
    %29 = arith.addf %27, %28 : vector<128x256xf32>
    %cst_15 = arith.constant 0.000000e+00 : f32
    %30 = vector.broadcast %cst_15 : f32 to vector<128x256xf32>
    %31 = arith.maximumf %29, %30 : vector<128x256xf32>
    %c0_16 = arith.constant 0 : index
    %c0_17 = arith.constant 0 : index
    %32 = vector.load %arg6[%c0_16, %c0_17] : memref<128x256xf32, #tpu.memory_space<vmem>>, vector<128x256xf32>
    tpu.vector_store %arg6[%c0_16, %c0_17], %31 {strides = array<i32>} : memref<128x256xf32, #tpu.memory_space<vmem>>, vector<128x256xf32>,
    return
  }
  func.func @transform_0(%arg0: i32) -> (i32, i32) {
    %c0_i32 = arith.constant 0 : i32
    %c0_i32_0 = arith.constant 0 : i32
    %c0_i32_1 = arith.constant 0 : i32
    return %c0_i32, %c0_i32_0 : i32, i32
  }
  func.func @transform_1(%arg0: i32) -> (i32, i32) {
    %c0_i32 = arith.constant 0 : i32
    %c0_i32_0 = arith.constant 0 : i32
    return %c0_i32, %arg0 : i32, i32
  }
  func.func @transform_2(%arg0: i32) -> (i32, i32) {
    %c0_i32 = arith.constant 0 : i32
    %c0_i32_0 = arith.constant 0 : i32
    return %c0_i32, %arg0 : i32, i32
  }
  func.func @transform_3(%arg0: i32) -> (i32, i32) {
    %c0_i32 = arith.constant 0 : i32
    %c0_i32_0 = arith.constant 0 : i32
    return %c0_i32, %arg0 : i32, i32
  }
  func.func @transform_4(%arg0: i32) -> (i32, i32) {
    %c0_i32 = arith.constant 0 : i32
    %c0_i32_0 = arith.constant 0 : i32
    return %c0_i32, %arg0 : i32, i32
  }
  func.func @transform_5(%arg0: i32) -> (i32, i32) {
    %c0_i32 = arith.constant 0 : i32
    %c0_i32_0 = arith.constant 0 : i32
    return %c0_i32, %arg0 : i32, i32
  }
}

</mosaic_0001>

<llo_original>
// kernel: conv_bn_add_relu.1
$region0: #{conv_bn_add_relu.1}
  #allocation0 [shape = 'u32[]', space=smem, size = 0x4, offset = 0x4, fixed_abs, tag = 'smem constant byte address 0x4 - core index']
  #allocation1 [shape = 'u32[144,128]{1,0:T(1,128)}', space=vmem, size = 0x12000, scoped, tag = 'internal scratch']
  %s0 = inlined_call_operand.vmem [shape: f32[128,128], index: 0, kind: input, shape index: {}]
  %s1 = inlined_call_operand.hbm [shape: f32[128,384], index: 1, kind: input, shape index: {}]
  %s2 = inlined_call_operand.vmem [shape: f32[1,384], index: 2, kind: input, shape index: {}]
  %s3 = inlined_call_operand.vmem [shape: f32[1,384], index: 3, kind: input, shape index: {}]
  %s4 = inlined_call_operand.hbm [shape: f32[128,384], index: 4, kind: input, shape index: {}]
  %s5 = inlined_call_operand.hbm [shape: f32[128,384], index: 5, kind: output, shape index: {}]
  %s6 = sld [smem:[#allocation0]]
  $region61: #{conv_bn_add_relu.1} parent=0
    _
  %s8 = ssub.s32 1, %s6
  %s9 = scalar_select 0, %s8, %s6
  $region1: #{conv_bn_add_relu.1} parent=0
    #allocation2 [shape = 'u8[262144]{0}', space=vmem, size = 0x40000, scoped, tag = 'input window, operand 1']
    #allocation3 [shape = 's32[2]{0}', space=sflag, size = 0x8, scoped, tag = 'scoped memory for conv_bn_add_relu.1']
    #allocation4 [shape = 's32[2]{0}', space=sflag, size = 0x8, scoped, tag = 'scoped memory for conv_bn_add_relu.1']
    #allocation5 [shape = 'u8[262144]{0}', space=vmem, size = 0x40000, scoped, tag = 'input window, operand 4']
    #allocation6 [shape = 's32[2]{0}', space=sflag, size = 0x8, scoped, tag = 'scoped memory for conv_bn_add_relu.1']
    #allocation7 [shape = 'u8[262144]{0}', space=vmem, size = 0x40000, scoped, tag = 'output window, operand 0']
    %10 = vsyncpa [#allocation3], 0
    %s11 = scalar_lea.sflag [#allocation3], 1
    %12 = vsyncpa %s11, 0
    %13 = vsyncpa [#allocation6], 0
    %s14 = scalar_lea.sflag [#allocation6], 1
    %15 = vsyncpa %s14, 0
    %16 = vsyncpa [#allocation4], 0
    %s17 = scalar_lea.sflag [#allocation4], 1
    %18 = vsyncpa %s17, 0
    loop: start=0, step=1, limit=4
    $region2: #{conv_bn_add_relu.1} parent=1 // loop_pre_header
      _
    $region3: #{conv_bn_add_relu.1} parent=1 // loop_header
      %s20 = sphi 0, %s24
      %p21 = scmp.ge.s32.totalorder %s20, 4
      %s28 = sphi 0, %s28
      %s30 = sphi 0, %s28
      %s31 = sphi 0, %s30
      %s45 = sphi 0, %s31
      %s51 = sphi 0, %s53
      %s54 = sphi 0, %s51
      %s55 = sphi 0, %s54
      %s71 = sphi 0, %s55
      %s77 = sphi 0, %s79
      %s80 = sphi 0, %s77
      %s81 = sphi 0, %s80
      %s97 = sphi 0, %s81
      %s103 = sphi 0, %s105
      %s106 = sphi 0, %s103
      %s107 = sphi 0, %s106
      %s123 = sphi 0, %s107
      %s129 = sphi 0, %s131
      %s132 = sphi 0, %s129
      %s133 = sphi 0, %s132
      %s149 = sphi 0, %s133
      %s155 = sphi 0, %s157
      %s158 = sphi 0, %s155
      %s159 = sphi 0, %s158
      %s175 = sphi 0, %s159
    $region4: #{conv_bn_add_relu.1} parent=1 // loop_header_branch
      %23 = sbr.rel (%p21) target = $region8
    $region5: #{conv_bn_add_relu.1} parent=1 // loop_body
      %s25 = ssub.s32 %s20, 1
      %s26 = ssub.s32 %s20, 2
      %s27 = sadd.s32 %s20, 1
      %s29 = sadd.s32 %s28, 1
      %p32 = scmp.eq.s32.totalorder %s20, 1
      %p33 = scmp.ne.s32.totalorder %s28, %s30
      %p34 = scmp.eq.s32.totalorder %s20, 0
      %p35 = por %p33, %p34
      %p36 = scmp.ne.s32.totalorder %s28, %s30
      %p37 = scmp.eq.s32.totalorder %s25, 1
      %p38 = por %p36, %p37
      %p39 = scmp.ne.s32.totalorder %s30, %s31
      %p40 = scmp.eq.s32.totalorder %s25, 0
      %p41 = por %p39, %p40
      %p42 = scmp.ne.s32.totalorder %s30, %s31
      %p43 = scmp.eq.s32.totalorder %s26, 1
      %p44 = por %p42, %p43
      %p46 = scmp.ne.s32.totalorder %s31, %s45
      %p47 = scmp.eq.s32.totalorder %s26, 0
      %p48 = por %p46, %p47
      %s49 = ssub.s32 %s20, %s27
      %p50 = scmp.eq.s32.totalorder %s49, 0
      %s52 = sadd.s32 %s51, 1
      %s53 = scalar_select %p50, %s51, %s52
      %p56 = pneg %p50
      %p57 = scmp.eq.s32.totalorder %s20, 1
      %p58 = por %p56, %p57
      %p59 = scmp.ne.s32.totalorder %s51, %s54
      %p60 = scmp.eq.s32.totalorder %s20, 0
      %p61 = por %p59, %p60
      %p62 = scmp.ne.s32.totalorder %s51, %s54
      %p63 = scmp.eq.s32.totalorder %s25, 1
      %p64 = por %p62, %p63
      %p65 = scmp.ne.s32.totalorder %s54, %s55
      %p66 = scmp.eq.s32.totalorder %s25, 0
      %p67 = por %p65, %p66
      %p68 = scmp.ne.s32.totalorder %s54, %s55
      %p69 = scmp.eq.s32.totalorder %s26, 1
      %p70 = por %p68, %p69
      %p72 = scmp.ne.s32.totalorder %s55, %s71
      %p73 = scmp.eq.s32.totalorder %s26, 0
      %p74 = por %p72, %p73
      %s75 = ssub.s32 %s20, %s27
      %p76 = scmp.eq.s32.totalorder %s75, 0
      %s78 = sadd.s32 %s77, 1
      %s79 = scalar_select %p76, %s77, %s78
      %p82 = pneg %p76
      %p83 = scmp.eq.s32.totalorder %s20, 1
      %p84 = por %p82, %p83
      %p85 = scmp.ne.s32.totalorder %s77, %s80
      %p86 = scmp.eq.s32.totalorder %s20, 0
      %p87 = por %p85, %p86
      %p88 = scmp.ne.s32.totalorder %s77, %s80
      %p89 = scmp.eq.s32.totalorder %s25, 1
      %p90 = por %p88, %p89
      %p91 = scmp.ne.s32.totalorder %s80, %s81
      %p92 = scmp.eq.s32.totalorder %s25, 0
      %p93 = por %p91, %p92
      %p94 = scmp.ne.s32.totalorder %s80, %s81
      %p95 = scmp.eq.s32.totalorder %s26, 1
      %p96 = por %p94, %p95
      %p98 = scmp.ne.s32.totalorder %s81, %s97
      %p99 = scmp.eq.s32.totalorder %s26, 0
      %p100 = por %p98, %p99
      %s101 = ssub.s32 %s20, %s27
      %p102 = scmp.eq.s32.totalorder %s101, 0
      %s104 = sadd.s32 %s103, 1
      %s105 = scalar_select %p102, %s103, %s104
      %p108 = pneg %p102
      %p109 = scmp.eq.s32.totalorder %s20, 1
      %p110 = por %p108, %p109
      %p111 = scmp.ne.s32.totalorder %s103, %s106
      %p112 = scmp.eq.s32.totalorder %s20, 0
      %p113 = por %p111, %p112
      %p114 = scmp.ne.s32.totalorder %s103, %s106
      %p115 = scmp.eq.s32.totalorder %s25, 1
      %p116 = por %p114, %p115
      %p117 = scmp.ne.s32.totalorder %s106, %s107
      %p118 = scmp.eq.s32.totalorder %s25, 0
      %p119 = por %p117, %p118
      %p120 = scmp.ne.s32.totalorder %s106, %s107
      %p121 = scmp.eq.s32.totalorder %s26, 1
      %p122 = por %p120, %p121
      %p124 = scmp.ne.s32.totalorder %s107, %s123
      %p125 = scmp.eq.s32.totalorder %s26, 0
      %p126 = por %p124, %p125
      %s127 = ssub.s32 %s20, %s27
      %p128 = scmp.eq.s32.totalorder %s127, 0
      %s130 = sadd.s32 %s129, 1
      %s131 = scalar_select %p128, %s129, %s130
      %p134 = pneg %p128
      %p135 = scmp.eq.s32.totalorder %s20, 1
      %p136 = por %p134, %p135
      %p137 = scmp.ne.s32.totalorder %s129, %s132
      %p138 = scmp.eq.s32.totalorder %s20, 0
      %p139 = por %p137, %p138
      %p140 = scmp.ne.s32.totalorder %s129, %s132
      %p141 = scmp.eq.s32.totalorder %s25, 1
      %p142 = por %p140, %p141
      %p143 = scmp.ne.s32.totalorder %s132, %s133
      %p144 = scmp.eq.s32.totalorder %s25, 0
      %p145 = por %p143, %p144
      %p146 = scmp.ne.s32.totalorder %s132, %s133
      %p147 = scmp.eq.s32.totalorder %s26, 1
      %p148 = por %p146, %p147
      %p150 = scmp.ne.s32.totalorder %s133, %s149
      %p151 = scmp.eq.s32.totalorder %s26, 0
      %p152 = por %p150, %p151
      %s153 = ssub.s32 %s20, %s27
      %p154 = scmp.eq.s32.totalorder %s153, 0
      %s156 = sadd.s32 %s155, 1
      %s157 = scalar_select %p154, %s155, %s156
      %p160 = pneg %p154
      %p161 = scmp.eq.s32.totalorder %s20, 1
      %p162 = por %p160, %p161
      %p163 = scmp.ne.s32.totalorder %s155, %s158
      %p164 = scmp.eq.s32.totalorder %s20, 0
      %p165 = por %p163, %p164
      %p166 = scmp.ne.s32.totalorder %s155, %s158
      %p167 = scmp.eq.s32.totalorder %s25, 1
      %p168 = por %p166, %p167
      %p169 = scmp.ne.s32.totalorder %s158, %s159
      %p170 = scmp.eq.s32.totalorder %s25, 0
      %p171 = por %p169, %p170
      %p172 = scmp.ne.s32.totalorder %s158, %s159
      %p173 = scmp.eq.s32.totalorder %s26, 1
      %p174 = por %p172, %p173
      %p176 = scmp.ne.s32.totalorder %s159, %s175
      %p177 = scmp.eq.s32.totalorder %s26, 0
      %p178 = por %p176, %p177
      %p179 = scmp.le.s32.totalorder 1, %s20
      %p180 = scmp.lt.s32.totalorder %s20, 3
      %p181 = pnand %p179, %p180
      %p182 = pneg %p181
      // Predicated region
      $region9: #{conv_bn_add_relu.1} parent=5 // pred_check
        _
      $region10: #{conv_bn_add_relu.1} parent=5 // pred_check_branch
        %184 = sbr.rel (%p181) target = $region12
      $region11: #{conv_bn_add_relu.1} parent=5 // pred_region
        %s185 = ssub.s32 %s20, 1
        // Predicated region
        $region13: #{conv_bn_add_relu.1} parent=11 // pred_check
          %p186 = pneg %p41
        $region14: #{conv_bn_add_relu.1} parent=11 // pred_check_branch
          %188 = sbr.rel (%p186) target = $region16
        $region15: #{conv_bn_add_relu.1} parent=11 // pred_region
          _
        $region16: #{conv_bn_add_relu.1} parent=11 // pred_fallthru
          _
      $region12: #{conv_bn_add_relu.1} parent=5 // pred_fallthru
        _
      %p189 = scmp.lt.s32.totalorder %s20, 2
      // Predicated region
      $region17: #{conv_bn_add_relu.1} parent=5 // pred_check
        %p190 = pneg %p189
      $region18: #{conv_bn_add_relu.1} parent=5 // pred_check_branch
        %192 = sbr.rel (%p190) target = $region20
      $region19: #{conv_bn_add_relu.1} parent=5 // pred_region
        // Predicated region
        $region21: #{conv_bn_add_relu.1} parent=19 // pred_check
          %p193 = pneg %p61
        $region22: #{conv_bn_add_relu.1} parent=19 // pred_check_branch
          %195 = sbr.rel (%p193) target = $region24
        $region23: #{conv_bn_add_relu.1} parent=19 // pred_region
          %s196 = sand.u32 %s51, 1
          %s197 = scalar_lea.sflag [#allocation3], %s196
          %s198 = sand.u32 %s51, 1
          %s199 = smul.addr %s198, 256
          %s200 = scalar_lea.vmem [#allocation2], %s199
          %s201 = smul.u32 2, %s20
          %s202 = ssub.s32 3, %s201
          %p203 = scmp.lt.s32.totalorder %s202, 2
          %s204 = scalar_select %p203, %s202, 2
          %s205 = smul.u32 2048, %s204
          %s207 = ssub.s32 4096, %s205
          %208 = vsyncadd %s197, %s207
          %p209 = scmp.ne.s32.totalorder 0, %s205
          %s210 = smul.addr %s201, 128
          %s211 = scalar_lea.hbm %s1, %s210
          %s212 = smul.u32 %s204, 8
          %s213 = smul.u32 %s212, 16
          %s214 = sshll.u32 %s200, 4
          %s215 = int_to_ptr.vmem [resolvable:$true] %s214
          %s216 = sshll.u32 %s213, 4
          %220 = dma.hbm_to_vmem [thread:$0]  (%p209), %s211, %s216, %s215, %s197, 384, 256, %s212
        $region24: #{conv_bn_add_relu.1} parent=19 // pred_fallthru
          _
        // Predicated region
        $region25: #{conv_bn_add_relu.1} parent=19 // pred_check
          %p221 = pneg %p87
        $region26: #{conv_bn_add_relu.1} parent=19 // pred_check_branch
          %223 = sbr.rel (%p221) target = $region28
        $region27: #{conv_bn_add_relu.1} parent=19 // pred_region
          %s224 = smul.u32 2, %s20
          %s225 = ssub.s32 3, %s224
          %p226 = scmp.lt.s32.totalorder %s225, 2
          %s227 = scalar_select %p226, %s225, 2
          %s228 = smul.u32 16, %s227
          %p229 = scmp.lt.s32.totalorder %s224, 2
          %s230 = scalar_select %p229, %s224, 2
          %s231 = scalar_lea.vmem %s2, %s230
          %s232 = smul.u32 2, %s20
          %s233 = ssub.s32 3, %s232
          %p234 = scmp.lt.s32.totalorder %s233, 2
          %s235 = scalar_select %p234, %s233, 2
          %s236 = smul.u32 16, %s235
        $region28: #{conv_bn_add_relu.1} parent=19 // pred_fallthru
          _
        // Predicated region
        $region29: #{conv_bn_add_relu.1} parent=19 // pred_check
          %p237 = pneg %p113
        $region30: #{conv_bn_add_relu.1} parent=19 // pred_check_branch
          %239 = sbr.rel (%p237) target = $region32
        $region31: #{conv_bn_add_relu.1} parent=19 // pred_region
          %s240 = smul.u32 2, %s20
          %s241 = ssub.s32 3, %s240
          %p242 = scmp.lt.s32.totalorder %s241, 2
          %s243 = scalar_select %p242, %s241, 2
          %s244 = smul.u32 16, %s243
          %p245 = scmp.lt.s32.totalorder %s240, 2
          %s246 = scalar_select %p245, %s240, 2
          %s247 = scalar_lea.vmem %s3, %s246
          %s248 = smul.u32 2, %s20
          %s249 = ssub.s32 3, %s248
          %p250 = scmp.lt.s32.totalorder %s249, 2
          %s251 = scalar_select %p250, %s249, 2
          %s252 = smul.u32 16, %s251
        $region32: #{conv_bn_add_relu.1} parent=19 // pred_fallthru
          _
        // Predicated region
        $region33: #{conv_bn_add_relu.1} parent=19 // pred_check
          %p253 = pneg %p139
        $region34: #{conv_bn_add_relu.1} parent=19 // pred_check_branch
          %255 = sbr.rel (%p253) target = $region36
        $region35: #{conv_bn_add_relu.1} parent=19 // pred_region
          %s256 = sand.u32 %s129, 1
          %s257 = scalar_lea.sflag [#allocation6], %s256
          %s258 = sand.u32 %s129, 1
          %s259 = smul.addr %s258, 256
          %s260 = scalar_lea.vmem [#allocation5], %s259
          %s261 = smul.u32 2, %s20
          %s262 = ssub.s32 3, %s261
          %p263 = scmp.lt.s32.totalorder %s262, 2
          %s264 = scalar_select %p263, %s262, 2
          %s265 = smul.u32 2048, %s264
          %s267 = ssub.s32 4096, %s265
          %268 = vsyncadd %s257, %s267
          %p269 = scmp.ne.s32.totalorder 0, %s265
          %s270 = smul.addr %s261, 128
          %s271 = scalar_lea.hbm %s4, %s270
          %s272 = smul.u32 %s264, 8
          %s273 = smul.u32 %s272, 16
          %s274 = sshll.u32 %s260, 4
          %s275 = int_to_ptr.vmem [resolvable:$true] %s274
          %s276 = sshll.u32 %s273, 4
          %280 = dma.hbm_to_vmem [thread:$0]  (%p269), %s271, %s276, %s275, %s257, 384, 256, %s272
        $region36: #{conv_bn_add_relu.1} parent=19 // pred_fallthru
          _
      $region20: #{conv_bn_add_relu.1} parent=5 // pred_fallthru
        _
      %p281 = scmp.le.s32.totalorder 1, %s20
      %p282 = scmp.lt.s32.totalorder %s20, 3
      %p283 = pnand %p281, %p282
      %p284 = pneg %p283
      // Predicated region
      $region37: #{conv_bn_add_relu.1} parent=5 // pred_check
        _
      $region38: #{conv_bn_add_relu.1} parent=5 // pred_check_branch
        %286 = sbr.rel (%p283) target = $region40
      $region39: #{conv_bn_add_relu.1} parent=5 // pred_region
        %s287 = ssub.s32 %s20, 1
        %s288 = sand.u32 %s54, 1
        %s289 = scalar_lea.sflag [#allocation3], %s288
        %s290 = sand.u32 %s54, 1
        %s291 = smul.addr %s290, 256
        %s292 = scalar_lea.vmem [#allocation2], %s291
        // Predicated region
        $region41: #{conv_bn_add_relu.1} parent=39 // pred_check
          %p293 = pneg %p67
        $region42: #{conv_bn_add_relu.1} parent=39 // pred_check_branch
          %295 = sbr.rel (%p293) target = $region44
        $region43: #{conv_bn_add_relu.1} parent=39 // pred_region
          %296 = dma.done %s289, 4096
        $region44: #{conv_bn_add_relu.1} parent=39 // pred_fallthru
          _
        %s297 = sand.u32 %s132, 1
        %s298 = scalar_lea.sflag [#allocation6], %s297
        %s299 = sand.u32 %s132, 1
        %s300 = smul.addr %s299, 256
        %s301 = scalar_lea.vmem [#allocation5], %s300
        // Predicated region
        $region45: #{conv_bn_add_relu.1} parent=39 // pred_check
          %p302 = pneg %p145
        $region46: #{conv_bn_add_relu.1} parent=39 // pred_check_branch
          %304 = sbr.rel (%p302) target = $region48
        $region47: #{conv_bn_add_relu.1} parent=39 // pred_region
          %305 = dma.done %s298, 4096
        $region48: #{conv_bn_add_relu.1} parent=39 // pred_fallthru
          _
        %p306 = pneg %p41
        %p307 = pneg %p38
        %s308 = sand.u32 %s54, 1
        %s309 = scalar_lea.sflag [#allocation3], %s308
        %s310 = sand.u32 %s54, 1
        %s311 = smul.addr %s310, 256
        %s312 = scalar_lea.vmem [#allocation2], %s311
        %p313 = pneg %p67
        %p314 = pneg %p64
        %s315 = smul.u32 2, %s25
        %s316 = ssub.s32 3, %s315
        %p317 = scmp.lt.s32.totalorder %s316, 2
        %s318 = scalar_select %p317, %s316, 2
        %s319 = smul.u32 16, %s318
        %p320 = scmp.lt.s32.totalorder %s315, 2
        %s321 = scalar_select %p320, %s315, 2
        %s322 = scalar_lea.vmem %s2, %s321
        %p323 = pneg %p93
        %p324 = pneg %p90
        %s325 = smul.u32 2, %s25
        %s326 = ssub.s32 3, %s325
        %p327 = scmp.lt.s32.totalorder %s326, 2
        %s328 = scalar_select %p327, %s326, 2
        %s329 = smul.u32 16, %s328
        %p330 = scmp.lt.s32.totalorder %s325, 2
        %s331 = scalar_select %p330, %s325, 2
        %s332 = scalar_lea.vmem %s3, %s331
        %p333 = pneg %p119
        %p334 = pneg %p116
        %s335 = sand.u32 %s132, 1
        %s336 = scalar_lea.sflag [#allocation6], %s335
        %s337 = sand.u32 %s132, 1
        %s338 = smul.addr %s337, 256
        %s339 = scalar_lea.vmem [#allocation5], %s338
        %p340 = pneg %p145
        %p341 = pneg %p142
        %p342 = pneg %p171
        %p343 = pneg %p168
        %s344 = sand.u32 %s158, 1
        %s345 = scalar_lea.sflag [#allocation4], %s344
        %s346 = sand.u32 %s158, 1
        %s347 = smul.addr %s346, 256
        %s348 = scalar_lea.vmem [#allocation7], %s347
        %s349 = smul.u32 2, %s25
        %s350 = ssub.s32 3, %s349
        %p351 = scmp.lt.s32.totalorder %s350, 2
        %s352 = scalar_select %p351, %s350, 2
        %s353 = smul.u32 2048, %s352
        %s354 = smul.u32 2, %s25
        %s355 = ssub.s32 3, %s354
        %p356 = scmp.lt.s32.totalorder %s355, 2
        %s357 = scalar_select %p356, %s355, 2
        %s358 = smul.u32 16, %s357
        %p359 = scmp.lt.s32.totalorder %s354, 2
        %s360 = scalar_select %p359, %s354, 2
        %s361 = scalar_lea.vmem %s2, %s360
        %s362 = smul.u32 2, %s25
        %s363 = ssub.s32 3, %s362
        %p364 = scmp.lt.s32.totalorder %s363, 2
        %s365 = scalar_select %p364, %s363, 2
        %s366 = smul.u32 16, %s365
        %s367 = smul.u32 2, %s25
        %s368 = ssub.s32 3, %s367
        %p369 = scmp.lt.s32.totalorder %s368, 2
        %s370 = scalar_select %p369, %s368, 2
        %s371 = smul.u32 16, %s370
        %p372 = scmp.lt.s32.totalorder %s367, 2
        %s373 = scalar_select %p372, %s367, 2
        %s374 = scalar_lea.vmem %s3, %s373
        %s375 = smul.u32 2, %s25
        %s376 = ssub.s32 3, %s375
        %p377 = scmp.lt.s32.totalorder %s376, 2
        %s378 = scalar_select %p377, %s376, 2
        %s379 = smul.u32 16, %s378
        %s380 = smul.u32 2, %s25
        %s381 = ssub.s32 3, %s380
        %p382 = scmp.lt.s32.totalorder %s381, 2
        %s383 = scalar_select %p382, %s381, 2
        %s384 = smul.u32 2048, %s383
        %s385 = smul.u32 2, %s25
        %s386 = ssub.s32 3, %s385
        %p387 = scmp.lt.s32.totalorder %s386, 2
        %s388 = scalar_select %p387, %s386, 2
        %s389 = smul.u32 2048, %s388
        %v390 = vld [vmem:[%s0] sm:$0xff]
        %v391 = vld [vmem:[%s0 + $0x8] sm:$0xff]
        %v392 = vld [vmem:[%s0 + $0x10] sm:$0xff]
        %v393 = vld [vmem:[%s0 + $0x18] sm:$0xff]
        %v394 = vld [vmem:[%s0 + $0x20] sm:$0xff]
        %v395 = vld [vmem:[%s0 + $0x28] sm:$0xff]
        %v396 = vld [vmem:[%s0 + $0x30] sm:$0xff]
        %v397 = vld [vmem:[%s0 + $0x38] sm:$0xff]
        %v398 = vld [vmem:[%s0 + $0x40] sm:$0xff]
        %v399 = vld [vmem:[%s0 + $0x48] sm:$0xff]
        %v400 = vld [vmem:[%s0 + $0x50] sm:$0xff]
        %v401 = vld [vmem:[%s0 + $0x58] sm:$0xff]
        %v402 = vld [vmem:[%s0 + $0x60] sm:$0xff]
        %v403 = vld [vmem:[%s0 + $0x68] sm:$0xff]
        %v404 = vld [vmem:[%s0 + $0x70] sm:$0xff]
        %v405 = vld [vmem:[%s0 + $0x78] sm:$0xff]
        %v406 = vld [vmem:[%s292] sm:$0xff]
        %v407 = vld [vmem:[%s292 + $0x8] sm:$0xff]
        %v408 = vld [vmem:[%s292 + $0x10] sm:$0xff]
        %v409 = vld [vmem:[%s292 + $0x18] sm:$0xff]
        %v410 = vld [vmem:[%s292 + $0x20] sm:$0xff]
        %v411 = vld [vmem:[%s292 + $0x28] sm:$0xff]
        %v412 = vld [vmem:[%s292 + $0x30] sm:$0xff]
        %v413 = vld [vmem:[%s292 + $0x38] sm:$0xff]
        %v414 = vld [vmem:[%s292 + $0x40] sm:$0xff]
        %v415 = vld [vmem:[%s292 + $0x48] sm:$0xff]
        %v416 = vld [vmem:[%s292 + $0x50] sm:$0xff]
        %v417 = vld [vmem:[%s292 + $0x58] sm:$0xff]
        %v418 = vld [vmem:[%s292 + $0x60] sm:$0xff]
        %v419 = vld [vmem:[%s292 + $0x68] sm:$0xff]
        %v420 = vld [vmem:[%s292 + $0x70] sm:$0xff]
        %v421 = vld [vmem:[%s292 + $0x78] sm:$0xff]
        %v422 = vld [vmem:[%s292 + $0x80] sm:$0xff]
        %v423 = vld [vmem:[%s292 + $0x88] sm:$0xff]
        %v424 = vld [vmem:[%s292 + $0x90] sm:$0xff]
        %v425 = vld [vmem:[%s292 + $0x98] sm:$0xff]
        %v426 = vld [vmem:[%s292 + $0xa0] sm:$0xff]
        %v427 = vld [vmem:[%s292 + $0xa8] sm:$0xff]
        %v428 = vld [vmem:[%s292 + $0xb0] sm:$0xff]
        %v429 = vld [vmem:[%s292 + $0xb8] sm:$0xff]
        %v430 = vld [vmem:[%s292 + $0xc0] sm:$0xff]
        %v431 = vld [vmem:[%s292 + $0xc8] sm:$0xff]
        %v432 = vld [vmem:[%s292 + $0xd0] sm:$0xff]
        %v433 = vld [vmem:[%s292 + $0xd8] sm:$0xff]
        %v434 = vld [vmem:[%s292 + $0xe0] sm:$0xff]
        %v435 = vld [vmem:[%s292 + $0xe8] sm:$0xff]
        %v436 = vld [vmem:[%s292 + $0xf0] sm:$0xff]
        %v437 = vld [vmem:[%s292 + $0xf8] sm:$0xff]
        %438 = vmatprep.subr.mxu0 %v407
        %439 = vmatpush1.msra.mxu0 %v406
        %440 = vmatprep.subr.mxu0 %v409
        %441 = vmatpush1.msra.mxu0 %v408
        %442 = vmatprep.subr.mxu0 %v411
        %443 = vmatpush1.msra.mxu0 %v410
        %444 = vmatprep.subr.mxu0 %v413
        %445 = vmatpush1.msra.mxu0 %v412
        %446 = vmatprep.subr.mxu0 %v415
        %447 = vmatpush1.msra.mxu0 %v414
        %448 = vmatprep.subr.mxu0 %v417
        %449 = vmatpush1.msra.mxu0 %v416
        %450 = vmatprep.subr.mxu0 %v419
        %451 = vmatpush1.msra.mxu0 %v418
        %452 = vmatprep.subr.mxu0 %v421
        %453 = vmatpush1.msra.mxu0 %v420
        %454 = vmatprep.subr.mxu0 %v423
        %455 = vmatpush1.msra.mxu0 %v422
        %456 = vmatprep.subr.mxu0 %v425
        %457 = vmatpush1.msra.mxu0 %v424
        %458 = vmatprep.subr.mxu0 %v427
        %459 = vmatpush1.msra.mxu0 %v426
        %460 = vmatprep.subr.mxu0 %v429
        %461 = vmatpush1.msra.mxu0 %v428
        %462 = vmatprep.subr.mxu0 %v431
        %463 = vmatpush1.msra.mxu0 %v430
        %464 = vmatprep.subr.mxu0 %v433
        %465 = vmatpush1.msra.mxu0 %v432
        %466 = vmatprep.subr.mxu0 %v435
        %467 = vmatpush1.msra.mxu0 %v434
        %468 = vmatprep.subr.mxu0 %v437
        %469 = vmatpush1.msra.mxu0 %v436
        %470 = vmatprep.subr.mxu0 0.0
        %471 = vmatpush1.msra.mxu0 0.0
        %472 = vmatprep.subr.mxu0 0.0
        %473 = vmatpush1.msra.mxu0 0.0
        %474 = vmatprep.subr.mxu0 0.0
        %475 = vmatpush1.msra.mxu0 0.0
        %476 = vmatprep.subr.mxu0 0.0
        %477 = vmatpush1.msra.mxu0 0.0
        %478 = vmatprep.subr.mxu0 0.0
        %479 = vmatpush1.msra.mxu0 0.0
        %480 = vmatprep.subr.mxu0 0.0
        %481 = vmatpush1.msra.mxu0 0.0
        %482 = vmatprep.subr.mxu0 0.0
        %483 = vmatpush1.msra.mxu0 0.0
        %484 = vmatprep.subr.mxu0 0.0
        %485 = vmatpush1.msra.mxu0 0.0
        %486 = vmatprep.subr.mxu0 0.0
        %487 = vmatpush1.msra.mxu0 0.0
        %488 = vmatprep.subr.mxu0 0.0
        %489 = vmatpush1.msra.mxu0 0.0
        %490 = vmatprep.subr.mxu0 0.0
        %491 = vmatpush1.msra.mxu0 0.0
        %492 = vmatprep.subr.mxu0 0.0
        %493 = vmatpush1.msra.mxu0 0.0
        %494 = vmatprep.subr.mxu0 0.0
        %495 = vmatpush1.msra.mxu0 0.0
        %496 = vmatprep.subr.mxu0 0.0
        %497 = vmatpush1.msra.mxu0 0.0
        %498 = vmatprep.subr.mxu0 0.0
        %499 = vmatpush1.msra.mxu0 0.0
        %500 = vmatprep.subr.mxu0 0.0
        %501 = vmatpush1.msra.mxu0 0.0
        %502 = vmatprep.mubr.f32.mxu0 0.0
        %503 = vmatmul.mubr.f32.gmra.mrb[0].mxu0 %v390
        %v504 = vpop.f32.mrb[0].mxu0
        %v505 = vadd.f32 0.0, %v504
        %v506 = vpop.f32.mrb[0].mxu0
        %v507 = vadd.f32 0.0, %v506
        %508 = vmatprep.mubr.f32.mxu0 0.0
        %509 = vmatmul.mubr.f32.gmra.mrb[0].mxu0 %v391
        %v510 = vpop.f32.mrb[0].mxu0
        %v511 = vadd.f32 0.0, %v510
        %v512 = vpop.f32.mrb[0].mxu0
        %v513 = vadd.f32 0.0, %v512
        %514 = vmatprep.mubr.f32.mxu0 0.0
        %515 = vmatmul.mubr.f32.gmra.mrb[0].mxu0 %v392
        %v516 = vpop.f32.mrb[0].mxu0
        %v517 = vadd.f32 0.0, %v516
        %v518 = vpop.f32.mrb[0].mxu0
        %v519 = vadd.f32 0.0, %v518
        %520 = vmatprep.mubr.f32.mxu0 0.0
        %521 = vmatmul.mubr.f32.gmra.mrb[0].mxu0 %v393
        %v522 = vpop.f32.mrb[0].mxu0
        %v523 = vadd.f32 0.0, %v522
        %v524 = vpop.f32.mrb[0].mxu0
        %v525 = vadd.f32 0.0, %v524
        %526 = vmatprep.mubr.f32.mxu0 0.0
        %527 = vmatmul.mubr.f32.gmra.mrb[0].mxu0 %v394
        %v528 = vpop.f32.mrb[0].mxu0
        %v529 = vadd.f32 0.0, %v528
        %v530 = vpop.f32.mrb[0].mxu0
        %v531 = vadd.f32 0.0, %v530
        %532 = vmatprep.mubr.f32.mxu0 0.0
        %533 = vmatmul.mubr.f32.gmra.mrb[0].mxu0 %v395
        %v534 = vpop.f32.mrb[0].mxu0
        %v535 = vadd.f32 0.0, %v534
        %v536 = vpop.f32.mrb[0].mxu0
        %v537 = vadd.f32 0.0, %v536
        %538 = vmatprep.mubr.f32.mxu0 0.0
        %539 = vmatmul.mubr.f32.gmra.mrb[0].mxu0 %v396
        %v540 = vpop.f32.mrb[0].mxu0
        %v541 = vadd.f32 0.0, %v540
        %v542 = vpop.f32.mrb[0].mxu0
        %v543 = vadd.f32 0.0, %v542
        %544 = vmatprep.mubr.f32.mxu0 0.0
        %545 = vmatmul.mubr.f32.gmra.mrb[0].mxu0 %v397
        %v546 = vpop.f32.mrb[0].mxu0
        %v547 = vadd.f32 0.0, %v546
        %v548 = vpop.f32.mrb[0].mxu0
        %v549 = vadd.f32 0.0, %v548
        %550 = vmatprep.mubr.f32.mxu0 0.0
        %551 = vmatmul.mubr.f32.gmra.mrb[0].mxu0 %v398
        %v552 = vpop.f32.mrb[0].mxu0
        %v553 = vadd.f32 0.0, %v552
        %v554 = vpop.f32.mrb[0].mxu0
        %v555 = vadd.f32 0.0, %v554
        %556 = vmatprep.mubr.f32.mxu0 0.0
        %557 = vmatmul.mubr.f32.gmra.mrb[0].mxu0 %v399
        %v558 = vpop.f32.mrb[0].mxu0
        %v559 = vadd.f32 0.0, %v558
        %v560 = vpop.f32.mrb[0].mxu0
        %v561 = vadd.f32 0.0, %v560
        %562 = vmatprep.mubr.f32.mxu0 0.0
        %563 = vmatmul.mubr.f32.gmra.mrb[0].mxu0 %v400
        %v564 = vpop.f32.mrb[0].mxu0
        %v565 = vadd.f32 0.0, %v564
        %v566 = vpop.f32.mrb[0].mxu0
        %v567 = vadd.f32 0.0, %v566
        %568 = vmatprep.mubr.f32.mxu0 0.0
        %569 = vmatmul.mubr.f32.gmra.mrb[0].mxu0 %v401
        %v570 = vpop.f32.mrb[0].mxu0
        %v571 = vadd.f32 0.0, %v570
        %v572 = vpop.f32.mrb[0].mxu0
        %v573 = vadd.f32 0.0, %v572
        %574 = vmatprep.mubr.f32.mxu0 0.0
        %575 = vmatmul.mubr.f32.gmra.mrb[0].mxu0 %v402
        %v576 = vpop.f32.mrb[0].mxu0
        %v577 = vadd.f32 0.0, %v576
        %v578 = vpop.f32.mrb[0].mxu0
        %v579 = vadd.f32 0.0, %v578
        %580 = vmatprep.mubr.f32.mxu0 0.0
        %581 = vmatmul.mubr.f32.gmra.mrb[0].mxu0 %v403
        %v582 = vpop.f32.mrb[0].mxu0
        %v583 = vadd.f32 0.0, %v582
        %v584 = vpop.f32.mrb[0].mxu0
        %v585 = vadd.f32 0.0, %v584
        %586 = vmatprep.mubr.f32.mxu0 0.0
        %587 = vmatmul.mubr.f32.gmra.mrb[0].mxu0 %v404
        %v588 = vpop.f32.mrb[0].mxu0
        %v589 = vadd.f32 0.0, %v588
        %v590 = vpop.f32.mrb[0].mxu0
        %v591 = vadd.f32 0.0, %v590
        %592 = vmatprep.mubr.f32.mxu0 0.0
        %593 = vmatmul.mubr.f32.gmra.mrb[0].mxu0 %v405
        %v594 = vpop.f32.mrb[0].mxu0
        %v595 = vadd.f32 0.0, %v594
        %v596 = vpop.f32.mrb[0].mxu0
        %v597 = vadd.f32 0.0, %v596
        %598 = vdwg.mxu0
        %v599 = vadd.f32 %v505, %v511
        %v600 = vadd.f32 %v599, %v517
        %v601 = vadd.f32 %v600, %v523
        %v602 = vadd.f32 %v601, %v529
        %v603 = vadd.f32 %v602, %v535
        %v604 = vadd.f32 %v603, %v541
        %v605 = vadd.f32 %v604, %v547
        %v606 = vadd.f32 %v605, %v553
        %v607 = vadd.f32 %v606, %v559
        %v608 = vadd.f32 %v607, %v565
        %v609 = vadd.f32 %v608, %v571
        %v610 = vadd.f32 %v609, %v577
        %v611 = vadd.f32 %v610, %v583
        %v612 = vadd.f32 %v611, %v589
        %v613 = vadd.f32 %v612, %v595
        %v614 = vrot.slane %v613, 4
        %v615 = vadd.f32 %v613, %v614
        %v616 = vrot.slane %v615, 2
        %v617 = vadd.f32 %v615, %v616
        %v618 = vrot.slane %v617, 1
        %v619 = vadd.f32 %v617, %v618
        %v620 = vadd.f32 %v507, %v513
        %v621 = vadd.f32 %v620, %v519
        %v622 = vadd.f32 %v621, %v525
        %v623 = vadd.f32 %v622, %v531
        %v624 = vadd.f32 %v623, %v537
        %v625 = vadd.f32 %v624, %v543
        %v626 = vadd.f32 %v625, %v549
        %v627 = vadd.f32 %v626, %v555
        %v628 = vadd.f32 %v627, %v561
        %v629 = vadd.f32 %v628, %v567
        %v630 = vadd.f32 %v629, %v573
        %v631 = vadd.f32 %v630, %v579
        %v632 = vadd.f32 %v631, %v585
        %v633 = vadd.f32 %v632, %v591
        %v634 = vadd.f32 %v633, %v597
        %v635 = vrot.slane %v634, 4
        %v636 = vadd.f32 %v634, %v635
        %v637 = vrot.slane %v636, 2
        %v638 = vadd.f32 %v636, %v637
        %v639 = vrot.slane %v638, 1
        %v640 = vadd.f32 %v638, %v639
        %v641 = vmul.f32 %v619, 0.0078125
        %v642 = vmul.f32 %v640, 0.0078125
        %v643 = vmul.f32 %v505, %v505
        %v644 = vmul.f32 %v507, %v507
        %v645 = vmul.f32 %v511, %v511
        %v646 = vmul.f32 %v513, %v513
        %v647 = vmul.f32 %v517, %v517
        %v648 = vmul.f32 %v519, %v519
        %v649 = vmul.f32 %v523, %v523
        %v650 = vmul.f32 %v525, %v525
        %v651 = vmul.f32 %v529, %v529
        %v652 = vmul.f32 %v531, %v531
        %v653 = vmul.f32 %v535, %v535
        %v654 = vmul.f32 %v537, %v537
        %v655 = vmul.f32 %v541, %v541
        %v656 = vmul.f32 %v543, %v543
        %v657 = vmul.f32 %v547, %v547
        %v658 = vmul.f32 %v549, %v549
        %v659 = vmul.f32 %v553, %v553
        %v660 = vmul.f32 %v555, %v555
        %v661 = vmul.f32 %v559, %v559
        %v662 = vmul.f32 %v561, %v561
        %v663 = vmul.f32 %v565, %v565
        %v664 = vmul.f32 %v567, %v567
        %v665 = vmul.f32 %v571, %v571
        %v666 = vmul.f32 %v573, %v573
        %v667 = vmul.f32 %v577, %v577
        %v668 = vmul.f32 %v579, %v579
        %v669 = vmul.f32 %v583, %v583
        %v670 = vmul.f32 %v585, %v585
        %v671 = vmul.f32 %v589, %v589
        %v672 = vmul.f32 %v591, %v591
        %v673 = vmul.f32 %v595, %v595
        %v674 = vmul.f32 %v597, %v597
        %v675 = vadd.f32 %v643, %v645
        %v676 = vadd.f32 %v675, %v647
        %v677 = vadd.f32 %v676, %v649
        %v678 = vadd.f32 %v677, %v651
        %v679 = vadd.f32 %v678, %v653
        %v680 = vadd.f32 %v679, %v655
        %v681 = vadd.f32 %v680, %v657
        %v682 = vadd.f32 %v681, %v659
        %v683 = vadd.f32 %v682, %v661
        %v684 = vadd.f32 %v683, %v663
        %v685 = vadd.f32 %v684, %v665
        %v686 = vadd.f32 %v685, %v667
        %v687 = vadd.f32 %v686, %v669
        %v688 = vadd.f32 %v687, %v671
        %v689 = vadd.f32 %v688, %v673
        %v690 = vrot.slane %v689, 4
        %v691 = vadd.f32 %v689, %v690
        %v692 = vrot.slane %v691, 2
        %v693 = vadd.f32 %v691, %v692
        %v694 = vrot.slane %v693, 1
        %v695 = vadd.f32 %v693, %v694
        %v696 = vadd.f32 %v644, %v646
        %v697 = vadd.f32 %v696, %v648
        %v698 = vadd.f32 %v697, %v650
        %v699 = vadd.f32 %v698, %v652
        %v700 = vadd.f32 %v699, %v654
        %v701 = vadd.f32 %v700, %v656
        %v702 = vadd.f32 %v701, %v658
        %v703 = vadd.f32 %v702, %v660
        %v704 = vadd.f32 %v703, %v662
        %v705 = vadd.f32 %v704, %v664
        %v706 = vadd.f32 %v705, %v666
        %v707 = vadd.f32 %v706, %v668
        %v708 = vadd.f32 %v707, %v670
        %v709 = vadd.f32 %v708, %v672
        %v710 = vadd.f32 %v709, %v674
        %v711 = vrot.slane %v710, 4
        %v712 = vadd.f32 %v710, %v711
        %v713 = vrot.slane %v712, 2
        %v714 = vadd.f32 %v712, %v713
        %v715 = vrot.slane %v714, 1
        %v716 = vadd.f32 %v714, %v715
        %v717 = vmul.f32 %v695, 0.0078125
        %v718 = vmul.f32 %v716, 0.0078125
        %v719 = vmul.f32 %v641, %v641
        %v720 = vmul.f32 %v642, %v642
        %v721 = vsub.f32 %v717, %v719
        %v722 = vsub.f32 %v718, %v720
        %v723 = vmax.f32 %v721, 0.0
        %v724 = vmax.f32 %v722, 0.0
        %v725 = vld [vmem:[%s361] sm:$0x3]
        %v726 = vadd.f32 %v723, 1e-05
        %v727 = vadd.f32 %v724, 1e-05
        %v728 = vrsqrt.pop %v726
        %v729 = vrsqrt.pop %v727
        %v732 = vcombine.low %v728, %v729
        %v734 = vunpack.c.l.s4 1966171168
        %v735 = vunpack.c.0.s8 %v734
        %v736 = vlaneseq
        %v737 = vshrl.u32 %v736, 7
        %v738 = vsub.s32 %v735, %v737
        %v739 = vrot.slane %v732, %v738
        %v741 = vunpack.c.l.s4 1966171168
        %v742 = vunpack.c.0.s8 %v741
        %v743 = vlaneseq
        %v744 = vshrl.u32 %v743, 7
        %v745 = vsub.s32 %v742, %v744
        %v746 = vrot.slane %v739, %v745
        %v748 = vmul.f32 %v725, %v746
        %v749 = vld [vmem:[%s374] sm:$0x3]
        %v751 = vlaneseq
        %v752 = vshrl.u32 %v751, 7
        %v753 = vsub.s32 0, %v752
        %v754 = vrot.slane %v748, %v753
        %v755 = vlaneseq
        %v756 = vshrl.u32 %v755, 7
        %v757 = vsub.s32 1, %v756
        %v758 = vrot.slane %v748, %v757
        %v761 = vmul.f32 %v641, %v754
        %v762 = vmul.f32 %v642, %v758
        %v765 = vcombine.low %v761, %v762
        %v767 = vunpack.c.l.s4 1966171168
        %v768 = vunpack.c.0.s8 %v767
        %v769 = vlaneseq
        %v770 = vshrl.u32 %v769, 7
        %v771 = vsub.s32 %v768, %v770
        %v772 = vrot.slane %v765, %v771
        %v774 = vunpack.c.l.s4 1966171168
        %v775 = vunpack.c.0.s8 %v774
        %v776 = vlaneseq
        %v777 = vshrl.u32 %v776, 7
        %v778 = vsub.s32 %v775, %v777
        %v779 = vrot.slane %v772, %v778
        %v781 = vsub.f32 %v749, %v779
        %v782 = vmul.f32 %v505, %v754
        %v783 = vmul.f32 %v507, %v758
        %v784 = vmul.f32 %v511, %v754
        %v785 = vmul.f32 %v513, %v758
        %v786 = vmul.f32 %v517, %v754
        %v787 = vmul.f32 %v519, %v758
        %v788 = vmul.f32 %v523, %v754
        %v789 = vmul.f32 %v525, %v758
        %v790 = vmul.f32 %v529, %v754
        %v791 = vmul.f32 %v531, %v758
        %v792 = vmul.f32 %v535, %v754
        %v793 = vmul.f32 %v537, %v758
        %v794 = vmul.f32 %v541, %v754
        %v795 = vmul.f32 %v543, %v758
        %v796 = vmul.f32 %v547, %v754
        %v797 = vmul.f32 %v549, %v758
        %v798 = vmul.f32 %v553, %v754
        %v799 = vmul.f32 %v555, %v758
        %v800 = vmul.f32 %v559, %v754
        %v801 = vmul.f32 %v561, %v758
        %v802 = vmul.f32 %v565, %v754
        %v803 = vmul.f32 %v567, %v758
        %v804 = vmul.f32 %v571, %v754
        %v805 = vmul.f32 %v573, %v758
        %v806 = vmul.f32 %v577, %v754
        %v807 = vmul.f32 %v579, %v758
        %v808 = vmul.f32 %v583, %v754
        %v809 = vmul.f32 %v585, %v758
        %v810 = vmul.f32 %v589, %v754
        %v811 = vmul.f32 %v591, %v758
        %v812 = vmul.f32 %v595, %v754
        %v813 = vmul.f32 %v597, %v758
        %v815 = vlaneseq
        %v816 = vshrl.u32 %v815, 7
        %v817 = vsub.s32 0, %v816
        %v818 = vrot.slane %v781, %v817
        %v819 = vlaneseq
        %v820 = vshrl.u32 %v819, 7
        %v821 = vsub.s32 1, %v820
        %v822 = vrot.slane %v781, %v821
        %v825 = vadd.f32 %v782, %v818
        %v826 = vadd.f32 %v783, %v822
        %v827 = vadd.f32 %v784, %v818
        %v828 = vadd.f32 %v785, %v822
        %v829 = vadd.f32 %v786, %v818
        %v830 = vadd.f32 %v787, %v822
        %v831 = vadd.f32 %v788, %v818
        %v832 = vadd.f32 %v789, %v822
        %v833 = vadd.f32 %v790, %v818
        %v834 = vadd.f32 %v791, %v822
        %v835 = vadd.f32 %v792, %v818
        %v836 = vadd.f32 %v793, %v822
        %v837 = vadd.f32 %v794, %v818
        %v838 = vadd.f32 %v795, %v822
        %v839 = vadd.f32 %v796, %v818
        %v840 = vadd.f32 %v797, %v822
        %v841 = vadd.f32 %v798, %v818
        %v842 = vadd.f32 %v799, %v822
        %v843 = vadd.f32 %v800, %v818
        %v844 = vadd.f32 %v801, %v822
        %v845 = vadd.f32 %v802, %v818
        %v846 = vadd.f32 %v803, %v822
        %v847 = vadd.f32 %v804, %v818
        %v848 = vadd.f32 %v805, %v822
        %v849 = vadd.f32 %v806, %v818
        %v850 = vadd.f32 %v807, %v822
        %v851 = vadd.f32 %v808, %v818
        %v852 = vadd.f32 %v809, %v822
        %v853 = vadd.f32 %v810, %v818
        %v854 = vadd.f32 %v811, %v822
        %v855 = vadd.f32 %v812, %v818
        %v856 = vadd.f32 %v813, %v822
        %v857 = vld [vmem:[%s301] sm:$0xff]
        %v858 = vld [vmem:[%s301 + $0x8] sm:$0xff]
        %v859 = vld [vmem:[%s301 + $0x10] sm:$0xff]
        %v860 = vld [vmem:[%s301 + $0x18] sm:$0xff]
        %v861 = vld [vmem:[%s301 + $0x20] sm:$0xff]
        %v862 = vld [vmem:[%s301 + $0x28] sm:$0xff]
        %v863 = vld [vmem:[%s301 + $0x30] sm:$0xff]
        %v864 = vld [vmem:[%s301 + $0x38] sm:$0xff]
        %v865 = vld [vmem:[%s301 + $0x40] sm:$0xff]
        %v866 = vld [vmem:[%s301 + $0x48] sm:$0xff]
        %v867 = vld [vmem:[%s301 + $0x50] sm:$0xff]
        %v868 = vld [vmem:[%s301 + $0x58] sm:$0xff]
        %v869 = vld [vmem:[%s301 + $0x60] sm:$0xff]
        %v870 = vld [vmem:[%s301 + $0x68] sm:$0xff]
        %v871 = vld [vmem:[%s301 + $0x70] sm:$0xff]
        %v872 = vld [vmem:[%s301 + $0x78] sm:$0xff]
        %v873 = vld [vmem:[%s301 + $0x80] sm:$0xff]
        %v874 = vld [vmem:[%s301 + $0x88] sm:$0xff]
        %v875 = vld [vmem:[%s301 + $0x90] sm:$0xff]
        %v876 = vld [vmem:[%s301 + $0x98] sm:$0xff]
        %v877 = vld [vmem:[%s301 + $0xa0] sm:$0xff]
        %v878 = vld [vmem:[%s301 + $0xa8] sm:$0xff]
        %v879 = vld [vmem:[%s301 + $0xb0] sm:$0xff]
        %v880 = vld [vmem:[%s301 + $0xb8] sm:$0xff]
        %v881 = vld [vmem:[%s301 + $0xc0] sm:$0xff]
        %v882 = vld [vmem:[%s301 + $0xc8] sm:$0xff]
        %v883 = vld [vmem:[%s301 + $0xd0] sm:$0xff]
        %v884 = vld [vmem:[%s301 + $0xd8] sm:$0xff]
        %v885 = vld [vmem:[%s301 + $0xe0] sm:$0xff]
        %v886 = vld [vmem:[%s301 + $0xe8] sm:$0xff]
        %v887 = vld [vmem:[%s301 + $0xf0] sm:$0xff]
        %v888 = vld [vmem:[%s301 + $0xf8] sm:$0xff]
        %v889 = vadd.f32 %v825, %v857
        %v890 = vadd.f32 %v826, %v858
        %v891 = vadd.f32 %v827, %v859
        %v892 = vadd.f32 %v828, %v860
        %v893 = vadd.f32 %v829, %v861
        %v894 = vadd.f32 %v830, %v862
        %v895 = vadd.f32 %v831, %v863
        %v896 = vadd.f32 %v832, %v864
        %v897 = vadd.f32 %v833, %v865
        %v898 = vadd.f32 %v834, %v866
        %v899 = vadd.f32 %v835, %v867
        %v900 = vadd.f32 %v836, %v868
        %v901 = vadd.f32 %v837, %v869
        %v902 = vadd.f32 %v838, %v870
        %v903 = vadd.f32 %v839, %v871
        %v904 = vadd.f32 %v840, %v872
        %v905 = vadd.f32 %v841, %v873
        %v906 = vadd.f32 %v842, %v874
        %v907 = vadd.f32 %v843, %v875
        %v908 = vadd.f32 %v844, %v876
        %v909 = vadd.f32 %v845, %v877
        %v910 = vadd.f32 %v846, %v878
        %v911 = vadd.f32 %v847, %v879
        %v912 = vadd.f32 %v848, %v880
        %v913 = vadd.f32 %v849, %v881
        %v914 = vadd.f32 %v850, %v882
        %v915 = vadd.f32 %v851, %v883
        %v916 = vadd.f32 %v852, %v884
        %v917 = vadd.f32 %v853, %v885
        %v918 = vadd.f32 %v854, %v886
        %v919 = vadd.f32 %v855, %v887
        %v920 = vadd.f32 %v856, %v888
        %v921 = vmax.f32 %v889, 0.0
        %v922 = vmax.f32 %v890, 0.0
        %v923 = vmax.f32 %v891, 0.0
        %v924 = vmax.f32 %v892, 0.0
        %v925 = vmax.f32 %v893, 0.0
        %v926 = vmax.f32 %v894, 0.0
        %v927 = vmax.f32 %v895, 0.0
        %v928 = vmax.f32 %v896, 0.0
        %v929 = vmax.f32 %v897, 0.0
        %v930 = vmax.f32 %v898, 0.0
        %v931 = vmax.f32 %v899, 0.0
        %v932 = vmax.f32 %v900, 0.0
        %v933 = vmax.f32 %v901, 0.0
        %v934 = vmax.f32 %v902, 0.0
        %v935 = vmax.f32 %v903, 0.0
        %v936 = vmax.f32 %v904, 0.0
        %v937 = vmax.f32 %v905, 0.0
        %v938 = vmax.f32 %v906, 0.0
        %v939 = vmax.f32 %v907, 0.0
        %v940 = vmax.f32 %v908, 0.0
        %v941 = vmax.f32 %v909, 0.0
        %v942 = vmax.f32 %v910, 0.0
        %v943 = vmax.f32 %v911, 0.0
        %v944 = vmax.f32 %v912, 0.0
        %v945 = vmax.f32 %v913, 0.0
        %v946 = vmax.f32 %v914, 0.0
        %v947 = vmax.f32 %v915, 0.0
        %v948 = vmax.f32 %v916, 0.0
        %v949 = vmax.f32 %v917, 0.0
        %v950 = vmax.f32 %v918, 0.0
        %v951 = vmax.f32 %v919, 0.0
        %v952 = vmax.f32 %v920, 0.0
        %953 = vst [vmem:[%s348] sm:$0xff] %v921
        %954 = vst [vmem:[%s348 + $0x8] sm:$0xff] %v922
        %955 = vst [vmem:[%s348 + $0x10] sm:$0xff] %v923
        %956 = vst [vmem:[%s348 + $0x18] sm:$0xff] %v924
        %957 = vst [vmem:[%s348 + $0x20] sm:$0xff] %v925
        %958 = vst [vmem:[%s348 + $0x28] sm:$0xff] %v926
        %959 = vst [vmem:[%s348 + $0x30] sm:$0xff] %v927
        %960 = vst [vmem:[%s348 + $0x38] sm:$0xff] %v928
        %961 = vst [vmem:[%s348 + $0x40] sm:$0xff] %v929
        %962 = vst [vmem:[%s348 + $0x48] sm:$0xff] %v930
        %963 = vst [vmem:[%s348 + $0x50] sm:$0xff] %v931
        %964 = vst [vmem:[%s348 + $0x58] sm:$0xff] %v932
        %965 = vst [vmem:[%s348 + $0x60] sm:$0xff] %v933
        %966 = vst [vmem:[%s348 + $0x68] sm:$0xff] %v934
        %967 = vst [vmem:[%s348 + $0x70] sm:$0xff] %v935
        %968 = vst [vmem:[%s348 + $0x78] sm:$0xff] %v936
        %969 = vst [vmem:[%s348 + $0x80] sm:$0xff] %v937
        %970 = vst [vmem:[%s348 + $0x88] sm:$0xff] %v938
        %971 = vst [vmem:[%s348 + $0x90] sm:$0xff] %v939
        %972 = vst [vmem:[%s348 + $0x98] sm:$0xff] %v940
        %973 = vst [vmem:[%s348 + $0xa0] sm:$0xff] %v941
        %974 = vst [vmem:[%s348 + $0xa8] sm:$0xff] %v942
        %975 = vst [vmem:[%s348 + $0xb0] sm:$0xff] %v943
        %976 = vst [vmem:[%s348 + $0xb8] sm:$0xff] %v944
        %977 = vst [vmem:[%s348 + $0xc0] sm:$0xff] %v945
        %978 = vst [vmem:[%s348 + $0xc8] sm:$0xff] %v946
        %979 = vst [vmem:[%s348 + $0xd0] sm:$0xff] %v947
        %980 = vst [vmem:[%s348 + $0xd8] sm:$0xff] %v948
        %981 = vst [vmem:[%s348 + $0xe0] sm:$0xff] %v949
        %982 = vst [vmem:[%s348 + $0xe8] sm:$0xff] %v950
        %983 = vst [vmem:[%s348 + $0xf0] sm:$0xff] %v951
        %984 = vst [vmem:[%s348 + $0xf8] sm:$0xff] %v952
        %s985 = sand.u32 %s158, 1
        %s986 = scalar_lea.sflag [#allocation4], %s985
        %s987 = sand.u32 %s158, 1
        %s988 = smul.addr %s987, 256
        %s989 = scalar_lea.vmem [#allocation7], %s988
        // Predicated region
        $region49: #{conv_bn_add_relu.1} parent=39 // pred_check
          %p990 = pneg %p168
        $region50: #{conv_bn_add_relu.1} parent=39 // pred_check_branch
          %992 = sbr.rel (%p990) target = $region52
        $region51: #{conv_bn_add_relu.1} parent=39 // pred_region
          %s993 = smul.u32 2, %s25
          %s994 = ssub.s32 3, %s993
          %p995 = scmp.lt.s32.totalorder %s994, 2
          %s996 = scalar_select %p995, %s994, 2
          %s997 = smul.u32 2048, %s996
          %s999 = ssub.s32 4096, %s997
          %1000 = vsyncadd %s986, %s999
          %p1001 = scmp.ne.s32.totalorder 0, %s997
          %s1002 = smul.addr %s993, 128
          %s1003 = scalar_lea.hbm %s5, %s1002
          %s1004 = smul.u32 %s996, 8
          %s1005 = smul.u32 %s1004, 16
          %s1006 = sshll.u32 %s989, 4
          %s1007 = int_to_ptr.vmem [resolvable:$true] %s1006
          %s1008 = sshll.u32 %s1005, 4
          %1012 = dma.vmem_to_hbm [thread:$0]  (%p1001), %s1007, %s1008, %s1003, %s986, 256, 384, %s1004
        $region52: #{conv_bn_add_relu.1} parent=39 // pred_fallthru
          _
      $region40: #{conv_bn_add_relu.1} parent=5 // pred_fallthru
        _
      %p1013 = scmp.le.s32.totalorder 2, %s20
      // Predicated region
      $region53: #{conv_bn_add_relu.1} parent=5 // pred_check
        %p1014 = pneg %p1013
      $region54: #{conv_bn_add_relu.1} parent=5 // pred_check_branch
        %1016 = sbr.rel (%p1014) target = $region56
      $region55: #{conv_bn_add_relu.1} parent=5 // pred_region
        %s1017 = ssub.s32 %s20, 2
        // Predicated region
        $region57: #{conv_bn_add_relu.1} parent=55 // pred_check
          %p1018 = pneg %p174
        $region58: #{conv_bn_add_relu.1} parent=55 // pred_check_branch
          %1020 = sbr.rel (%p1018) target = $region60
        $region59: #{conv_bn_add_relu.1} parent=55 // pred_region
          %s1021 = sand.u32 %s159, 1
          %s1022 = scalar_lea.sflag [#allocation4], %s1021
          %s1023 = sand.u32 %s159, 1
          %s1024 = smul.addr %s1023, 256
          %s1025 = scalar_lea.vmem [#allocation7], %s1024
          %1026 = dma.done %s1022, 4096
        $region60: #{conv_bn_add_relu.1} parent=55 // pred_fallthru
          _
      $region56: #{conv_bn_add_relu.1} parent=5 // pred_fallthru
        _
    $region6: #{conv_bn_add_relu.1} parent=1 // loop_footer
      %s24 = sadd.s32 1, %s20
    $region7: #{conv_bn_add_relu.1} parent=1 // loop_footer_branch
      %19 = sbr.rel target = $region3
    $region8: #{conv_bn_add_relu.1} parent=1 // loop_exit
      _
    %1027 = vsyncpa [#allocation3], 1
    %s1028 = scalar_lea.sflag [#allocation3], 1
    %1029 = vsyncpa %s1028, 1
    %1030 = vsyncpa [#allocation6], 1
    %s1031 = scalar_lea.sflag [#allocation6], 1
    %1032 = vsyncpa %s1031, 1
    %1033 = vsyncpa [#allocation4], 1
    %s1034 = scalar_lea.sflag [#allocation4], 1
    %1035 = vsyncpa %s1034, 1

</llo_original>
